<compile_context>
chip_gen: v5e
topology: v5e:2x2
jax: 0.10.0
libtpu: 0.0.40
codegen_flags: <defaults>
</compile_context>

<pallas_src>
import math
import numpy as np
import jax
import jax.numpy as jnp
from jax import lax
from jax.experimental import pallas as pl
from jax.experimental.pallas import tpu as pltpu


# ----------------------- fused coarse assign + match ------------------------

def make_assign_match_kernel(n1, hw, n1p, inv_temp):
    # n1 = HW + 1 (dustbin included), hw = HW, n1p = lane-padded width.
    mask_pad = (n1 != n1p)   # compile-time: skip padding mask when lane-dense

    def kernel(d0_ref, d1_ref, attn_ref, stats_ref):
        d0 = d0_ref[0]                                    # [tn0, Cc] bf16
        d1 = d1_ref[0]                                    # [Cc, n1p] bf16
        logits = jnp.dot(d0, d1, preferred_element_type=jnp.float32) * inv_temp
        col = lax.broadcasted_iota(jnp.int32, logits.shape, 1)
        if mask_pad:
            logits = jnp.where(col < n1, logits, -1e30)   # mask lane padding
        m = jnp.max(logits, axis=-1, keepdims=True)
        e = jnp.exp(logits - m)
        denom = jnp.sum(e, axis=-1, keepdims=True)
        probs = e * pl.reciprocal(denom, approx=True)     # EUP divide (free slot)
        # presentation-only attention matrix: write bf16 (halves HBM writeback)
        attn_ref[0] = probs.astype(attn_ref.dtype)
        # max / argmax over real columns only (exclude dustbin + padding);
        # lowest-index tie-break matches torch.max behaviour.
        pm = jnp.where(col < hw, probs, -1.0)
        conf = jnp.max(pm, axis=-1, keepdims=True)        # [tn0, 1] f32
        idx = jnp.min(jnp.where(pm >= conf, col, n1p), axis=-1, keepdims=True)
        # pack (conf, idx) lane-dense: lane 0 = conf, lane 1 = idx (as f32)
        colv = lax.broadcasted_iota(jnp.int32, stats_ref.shape[1:], 1)
        stats_ref[0] = (jnp.where(colv == 0, conf, 0.0)
                        + jnp.where(colv == 1, idx.astype(jnp.float32), 0.0))
    return kernel


def assign_and_match(desc0, desc1b):
    # TODO(synk): the Assign module's source is not provided; a scaled-dot
    # softmax assignment (temp = 1/sqrt(C)) stands in for it.
    b, c, n0 = desc0.shape
    n1 = desc1b.shape[2]                          # HW + 1 (dustbin appended)
    hw = n1 - 1
    n1p = pl.cdiv(n1, 128) * 128                  # lane-dense attention tile
    n0p = pl.cdiv(n0, 16) * 16                    # sublane-friendly for bf16 store
    # NOTE: raise the 128 cap to 256 on v6e/v7x (2x256 MXU) for large N0;
    # 128 is the safe choice across v5e/v6e/v7x and for this demo size.
    tn0 = n0p if n0p <= 128 else 128
    n0p = pl.cdiv(n0p, tn0) * tn0

    d0t = jnp.transpose(desc0, (0, 2, 1))                              # [B, N0, C]
    d0t = jnp.pad(d0t, ((0, 0), (0, n0p - n0), (0, 0))).astype(jnp.bfloat16)
    d1p = jnp.pad(desc1b, ((0, 0), (0, 0), (0, n1p - n1))).astype(jnp.bfloat16)

    kernel = make_assign_match_kernel(n1, hw, n1p, 1.0 / (c ** 0.5))
    attn_p, stats_p = pl.pallas_call(
        kernel,
        out_shape=(jax.ShapeDtypeStruct((b, n0p, n1p), jnp.bfloat16),
                   jax.ShapeDtypeStruct((b, n0p, 128), jnp.float32)),
        grid=(b, n0p // tn0),
        in_specs=[pl.BlockSpec((1, tn0, c), lambda bi, ni: (bi, ni, 0)),
                  pl.BlockSpec((1, c, n1p), lambda bi, ni: (bi, 0, 0))],
        out_specs=(pl.BlockSpec((1, tn0, n1p), lambda bi, ni: (bi, ni, 0)),
                   pl.BlockSpec((1, tn0, 128), lambda bi, ni: (bi, ni, 0))),
        compiler_params=pltpu.CompilerParams(
            dimension_semantics=("parallel", "parallel"),
            vmem_limit_bytes=32 * 1024 * 1024),
    )(d0t, d1p)
    attn = attn_p[:, :n0, :n1]        # presentation-only (matching is in-kernel)
    conf = stats_p[:, :n0, 0]
    matches = stats_p[:, :n0, 1].astype(jnp.int32)
    return attn, matches, conf


# ------------- fused fine path: down_proj + merge_feat + fine_match ---------

def make_fine_kernel(inv_temp):
    def kernel(d0_ref, d1_ref, f0_ref, f1_ref, wd_ref, wmf_ref, wmft_ref,
               wmc_ref, bd_ref, bm_ref, g4_ref, stats_ref):
        wd = wd_ref[...]
        wmf = wmf_ref[...]
        wmft = wmft_ref[...]
        wmc = wmc_ref[...]
        bd = bd_ref[...]
        bm = bm_ref[...]
        # down_proj of gathered coarse descriptors (MXU, bf16 in / f32 acc)
        c0 = jnp.dot(d0_ref[...], wd, preferred_element_type=jnp.float32) + bd
        c1 = jnp.dot(d1_ref[...], wd, preferred_element_type=jnp.float32) + bd
        # merge_feat, algebraically split: cat([fine, coarse]) @ [wmf; wmc]
        f0 = (jnp.dot(f0_ref[...], wmf, preferred_element_type=jnp.float32)
              + jnp.dot(c0.astype(jnp.bfloat16), wmc,
                        preferred_element_type=jnp.float32)
              + bm)                                       # [TM, Cf]  (WW0 == 1)
        base1 = (jnp.dot(c1.astype(jnp.bfloat16), wmc,
                         preferred_element_type=jnp.float32)
                 + bm)                                    # [TM, Cf]
        # sim[m,w] = sum_c f0[m,c] * (ff1[m,w,:] @ wmf + base1[m,:])[c]
        #          = sum_k ff1[m,w,k] * g[m,k] + off[m]
        # bulk of the C-contraction is the MXU GEMM g = f0 @ wmf^T; the small
        # WW1 x Cf window reduce stays on the VPU but multiplies in bf16 and
        # accumulates in f32 (keeps live vregs / spill traffic low at TM=128).
        g = jnp.dot(f0.astype(jnp.bfloat16), wmft,
                    preferred_element_type=jnp.float32)   # [TM, Cf]
        off = jnp.sum(f0 * base1, axis=-1, keepdims=True)  # [TM, 1]
        prod = f1_ref[...] * g.astype(jnp.bfloat16)[:, None, :]   # bf16 [TM,WW1,Cf]
        sim = jnp.sum(prod, axis=-1, dtype=jnp.float32) + off     # [TM, WW1]
        # softmax (temp = 1/sqrt(Cf)) in f32
        logits = sim * inv_temp
        m = jnp.max(logits, axis=-1, keepdims=True)
        e = jnp.exp(logits - m)
        heat = e * pl.reciprocal(jnp.sum(e, axis=-1, keepdims=True), approx=True)
        # DSNT moments via one small MXU matmul against [gx, gy, gx^2, gy^2]
        # (replaces four cross-lane XLU reductions; result is lane-dense).
        mom = jnp.dot(heat, g4_ref[...], preferred_element_type=jnp.float32)
        cx = mom[:, 0:1]
        cy = mom[:, 1:2]
        vx = mom[:, 2:3] - cx * cx
        vy = mom[:, 3:4] - cy * cy
        # reference: std = sum over coords of sqrt(clamp(var, 1e-10))
        std = jnp.sqrt(jnp.maximum(vx, 1e-10)) + jnp.sqrt(jnp.maximum(vy, 1e-10))
        # lanes 0,1 = cx, cy (already in mom); lane 2 = std; rest zero
        colv = lax.broadcasted_iota(jnp.int32, mom.shape, 1)
        stats_ref[...] = jnp.where(colv < 2, mom,
                                   jnp.where(colv == 2, std, 0.0))
    return kernel


def fine_match_fused(d0g, d1g, ff0, ff1u, w_down, b_down, w_merge, b_merge,
                     g4, tm=128):
    # tm=128 fills the MXU rows and amortizes per-grid-step overhead; on v7x
    # prefer 128 over 256 so small-M workloads still yield >=2 grid steps for
    # the two TensorCores.
    m, cc = d0g.shape
    cf = w_down.shape[1]
    ww1 = ff1u.shape[1]
    mpad = pl.cdiv(max(m, 1), tm) * tm
    pad = mpad - m

    def padm(x):
        return jnp.pad(x, ((0, pad),) + ((0, 0),) * (x.ndim - 1))

    d0g_p = padm(d0g).astype(jnp.bfloat16)
    d1g_p = padm(d1g).astype(jnp.bfloat16)
    ff0_p = padm(ff0).astype(jnp.bfloat16)
    ff1_p = padm(ff1u).astype(jnp.bfloat16)
    wmf = w_merge[:cf].astype(jnp.bfloat16)        # fine half of merge weight
    wmc = w_merge[cf:].astype(jnp.bfloat16)        # coarse half
    wmft = wmf.T                                   # pre-transposed for g = f0 @ wmf^T
    wd = w_down.astype(jnp.bfloat16)
    bd = b_down.reshape(1, cf).astype(jnp.float32)
    bm = b_merge.reshape(1, cf).astype(jnp.float32)
    g4 = g4.astype(jnp.float32)                    # [WW1, 128] moment matrix

    kernel = make_fine_kernel(1.0 / (cf ** 0.5))
    const = lambda i: (0, 0)
    stats = pl.pallas_call(
        kernel,
        out_shape=jax.ShapeDtypeStruct((mpad, 128), jnp.float32),
        grid=(mpad // tm,),
        in_specs=[pl.BlockSpec((tm, cc), lambda i: (i, 0)),
                  pl.BlockSpec((tm, cc), lambda i: (i, 0)),
                  pl.BlockSpec((tm, cf), lambda i: (i, 0)),
                  pl.BlockSpec((tm, ww1, cf), lambda i: (i, 0, 0)),
                  pl.BlockSpec((cc, cf), const),
                  pl.BlockSpec((cf, cf), const),
                  pl.BlockSpec((cf, cf), const),
                  pl.BlockSpec((cf, cf), const),
                  pl.BlockSpec((1, cf), const),
                  pl.BlockSpec((1, cf), const),
                  pl.BlockSpec((ww1, 128), const)],
        out_specs=pl.BlockSpec((tm, 128), lambda i: (i, 0)),
        compiler_params=pltpu.CompilerParams(
            dimension_semantics=("parallel",),
            vmem_limit_bytes=32 * 1024 * 1024),
    )(d0g_p, d1g_p, ff0_p, ff1_p, wd, wmf, wmft, wmc, bd, bm, g4)
    return stats[:m]                    # lanes 0,1,2 = cx, cy, std


# ------------------------------ JAX glue ops --------------------------------

def unfold_jax(x, k, stride, pad):
    # F.unfold(x, k, stride, pad) + rearrange 'n (c ww) l -> n l ww c'
    b, c, h, w = x.shape
    xp = jnp.pad(x, ((0, 0), (0, 0), (pad, pad), (pad, pad)))
    out_h = (h + 2 * pad - k) // stride + 1
    out_w = (w + 2 * pad - k) // stride + 1
    pats = []
    for ky in range(k):
        for kx in range(k):
            pats.append(xp[:, :,
                           ky:ky + stride * (out_h - 1) + 1:stride,
                           kx:kx + stride * (out_w - 1) + 1:stride])
    p = jnp.stack(pats, axis=2)                               # [B, C, ww, oh, ow]
    return p.reshape(b, c, k * k, out_h * out_w).transpose(0, 3, 2, 1)  # [B, L, ww, C]


# --------------------------------- driver -----------------------------------

if __name__ == "__main__":
    key = jax.random.PRNGKey(0)
    B = 2
    Cc = 64          # d_model_c
    Cf = 32          # d_model_f
    N0 = 8           # keypoints in image0
    Hc = Wc = 4      # coarse grid of image1
    HW = Hc * Wc
    Hf = Wf = 8      # fine feature map
    Hi = Wi = 32     # image size
    W1 = 5           # fine_window_size
    WW1 = W1 * W1
    match_threshold = 0.2

    ks = jax.random.split(key, 10)
    # TODO(synk): Extractor, KeypointEncoder, Assign and the SelfAttn/CrossAttn
    # GNN layers are not provided in the reference source; desc0/desc1 stand in
    # for their (post-GNN) outputs.
    desc0 = jax.random.normal(ks[0], (B, Cc, N0), jnp.float32) * 3.0
    desc1 = jax.random.normal(ks[1], (B, Cc, HW), jnp.float32) * 3.0
    feat_f0 = jax.random.normal(ks[2], (B, Cf, Hf, Wf), jnp.float32)
    feat_f1 = jax.random.normal(ks[3], (B, Cf, Hf, Wf), jnp.float32)
    kpts0 = jax.random.uniform(ks[4], (B, N0, 2), jnp.float32, 0.0, Wi - 1.0)
    # keypoints1 = coarse-cell centers in image coordinates (x, y)
    yy, xx = jnp.meshgrid(jnp.arange(Hc), jnp.arange(Wc), indexing="ij")
    kpts1 = jnp.stack([(xx + 0.5) * (Wi / Wc), (yy + 0.5) * (Hi / Hc)], -1)
    kpts1 = jnp.tile(kpts1.reshape(1, HW, 2).astype(jnp.float32), (B, 1, 1))

    # deterministic parameters (shapes from RCM.__init__)
    dustbin = jax.random.normal(ks[5], (1, Cc, 1), jnp.float32) * 0.2   # trunc_normal std=0.2
    w_down = jax.random.normal(ks[6], (Cc, Cf), jnp.float32) / math.sqrt(Cc)
    b_down = jnp.zeros((Cf,), jnp.float32)
    w_merge = jax.random.normal(ks[7], (2 * Cf, Cf), jnp.float32) / math.sqrt(2 * Cf)
    b_merge = jnp.zeros((Cf,), jnp.float32)

    # ---------------- coarse_match (test mode) ----------------
    desc1b = jnp.concatenate([desc1, jnp.tile(dustbin, (B, 1, 1))], axis=-1)  # [B, Cc, HW+1]
    attn, matches, conf = assign_and_match(desc0, desc1b)    # fused softmax + max/argmax

    conf_np = np.asarray(conf)
    matches_np = np.asarray(matches)
    valid = conf_np > match_threshold
    b_ids, i_ids = np.nonzero(valid)          # data-dependent torch.where -> host-side
    if len(b_ids) == 0:                       # keep the demo robust
        b_ids, i_ids = np.nonzero(conf_np >= conf_np.max())
    j_ids = matches_np[b_ids, i_ids]
    mconf = conf_np[b_ids, i_ids]
    M = len(b_ids)
    mkpts0_c = np.asarray(kpts0)[b_ids, i_ids]
    mkpts1_c = np.asarray(kpts1)[b_ids, j_ids]

    # ---------------- fine_preprocess (gathers stay in JAX glue) -------------
    stride = Hf // Hc
    scale_r2f = Hi // Hf
    k0 = np.floor(np.asarray(kpts0)[b_ids, i_ids] / scale_r2f).astype(np.int32)  # (x, y)

    ff0 = feat_f0[b_ids, :, k0[:, 1], k0[:, 0]]               # [M, Cf]  picked fine feat
    f1_unf = unfold_jax(feat_f1, W1, stride, W1 // 2)         # [B, HW, WW1, Cf]
    ff1u = f1_unf[b_ids, j_ids]                               # [M, WW1, Cf]
    d0g = desc0[b_ids, :, i_ids]                              # [M, Cc]
    d1g = desc1[b_ids, :, j_ids]                              # [M, Cc]

    # TODO(synk): AttentionalGNN_fine layers (CrossAttn_d2s / CrossLin_s2d) are
    # not provided; fine features pass through unchanged here.

    # ---------------- fine_match (down_proj + merge_feat + DSNT fused) -------
    xs = jnp.linspace(-1.0, 1.0, W1)
    gyy, gxx = jnp.meshgrid(xs, xs, indexing="ij")            # row = y, col = x
    gx = gxx.reshape(WW1).astype(jnp.float32)
    gy = gyy.reshape(WW1).astype(jnp.float32)
    # moment matrix for the in-kernel DSNT matmul: lanes 0..3 = gx, gy, gx^2, gy^2
    g4 = jnp.zeros((WW1, 128), jnp.float32)
    g4 = g4.at[:, 0].set(gx).at[:, 1].set(gy)
    g4 = g4.at[:, 2].set(gx * gx).at[:, 3].set(gy * gy)

    stats = fine_match_fused(d0g, d1g, ff0, ff1u, w_down, b_down,
                             w_merge, b_merge, g4)            # [M, 128]
    coords_normalized = stats[:, :2]                          # (x, y)
    expec_f = stats[:, :3]                                    # (x, y, std)

    # get_fine_match
    scale = Hi / Hf
    mkpts0_f = jnp.asarray(mkpts0_c)
    mkpts1_f = jnp.asarray(mkpts1_c) + (coords_normalized * (W1 // 2) * scale)[:len(mconf)]

    jax.block_until_ready((attn, matches, conf, expec_f, mkpts0_f, mkpts1_f))
    print("KERNEL_OK")
</pallas_src>

<mosaic_0001>
module attributes {stable_mosaic.version = 11 : i64} {
  func.func @kernel(%arg0: i32, %arg1: i32, %arg2: memref<1x16x64xbf16, #tpu.memory_space<vmem>>, %arg3: memref<1x64x128xbf16, #tpu.memory_space<vmem>>, %arg4: memref<1x16x128xbf16, #tpu.memory_space<vmem>>, %arg5: memref<1x16x128xf32, #tpu.memory_space<vmem>>) attributes {dimension_semantics = [#tpu.dimension_semantics<parallel>, #tpu.dimension_semantics<parallel>], iteration_bounds = array<i64: 2, 1>, scalar_prefetch = 0 : i64, scratch_operands = 0 : i64, tpu.core_type = #tpu.core_type<tc>, window_params = [{transform_indices = @transform_0, window_bounds = array<i64: 1, 16, 64>}, {transform_indices = @transform_1, window_bounds = array<i64: 1, 64, 128>}, {transform_indices = @transform_2, window_bounds = array<i64: 1, 16, 128>}, {transform_indices = @transform_3, window_bounds = array<i64: 1, 16, 128>}]} {
    %c0 = arith.constant 0 : index
    %c0_0 = arith.constant 0 : index
    %c0_1 = arith.constant 0 : index
    %0 = vector.load %arg2[%c0, %c0_0, %c0_1] : memref<1x16x64xbf16, #tpu.memory_space<vmem>>, vector<1x16x64xbf16>
    %1 = vector.shape_cast %0 : vector<1x16x64xbf16> to vector<16x64xbf16>
    %c0_2 = arith.constant 0 : index
    %c0_3 = arith.constant 0 : index
    %c0_4 = arith.constant 0 : index
    %2 = vector.load %arg3[%c0_2, %c0_3, %c0_4] : memref<1x64x128xbf16, #tpu.memory_space<vmem>>, vector<1x64x128xbf16>
    %3 = vector.shape_cast %2 : vector<1x64x128xbf16> to vector<64x128xbf16>
    %cst = arith.constant dense<0.000000e+00> : vector<16x128xf32>
    %4 = tpu.matmul %1, %3, %cst {dimension_numbers = #tpu.dot_dimension_numbers<[1], [0], [0], [1], [0, 0, 1, 1], [], []>} : vector<16x64xbf16>, vector<64x128xbf16>, vector<16x128xf32> -> vector<16x128xf32>
    %cst_5 = arith.constant 1.250000e-01 : f32
    %5 = vector.broadcast %cst_5 : f32 to vector<16x128xf32>
    %6 = arith.mulf %4, %5 : vector<16x128xf32>
    %7 = tpu.iota {dimensions = array<i32: 1>} : vector<16x128xi32>
    %c17_i32 = arith.constant 17 : i32
    %8 = vector.broadcast %c17_i32 : i32 to vector<16x128xi32>
    %9 = arith.cmpi slt, %7, %8 : vector<16x128xi32>
    %cst_6 = arith.constant -1.000000e+30 : f32
    %10 = vector.broadcast %cst_6 : f32 to vector<16x128xf32>
    %11 = arith.select %9, %6, %10 : vector<16x128xi1>, vector<16x128xf32>
    %cst_7 = arith.constant dense<0xFF800000> : vector<16xf32>
    %12 = vector.multi_reduction <maximumf>, %11, %cst_7 [1] : vector<16x128xf32> to vector<16xf32>
    %13 = vector.shape_cast %12 : vector<16xf32> to vector<16x1xf32>
    %14 = vector.broadcast %13 : vector<16x1xf32> to vector<16x128xf32>
    %15 = arith.subf %11, %14 : vector<16x128xf32>
    %16 = math.exp %15 : vector<16x128xf32>
    %cst_8 = arith.constant dense<0.000000e+00> : vector<16xf32>
    %17 = vector.multi_reduction <add>, %16, %cst_8 [1] : vector<16x128xf32> to vector<16xf32>
    %18 = vector.shape_cast %17 : vector<16xf32> to vector<16x1xf32>
    %19 = tpu.reciprocal %18 {approx = true} : vector<16x1xf32> -> vector<16x1xf32>
    %20 = vector.broadcast %19 : vector<16x1xf32> to vector<16x128xf32>
    %21 = arith.mulf %16, %20 : vector<16x128xf32>
    %22 = arith.truncf %21 : vector<16x128xf32> to vector<16x128xbf16>
    %c0_9 = arith.constant 0 : index
    %c0_10 = arith.constant 0 : index
    %c0_11 = arith.constant 0 : index
    %23 = vector.load %arg4[%c0_9, %c0_10, %c0_11] : memref<1x16x128xbf16, #tpu.memory_space<vmem>>, vector<1x16x128xbf16>
    %24 = vector.shape_cast %23 : vector<1x16x128xbf16> to vector<16x128xbf16>
    %25 = vector.shape_cast %22 : vector<16x128xbf16> to vector<1x16x128xbf16>
    tpu.vector_store %arg4[%c0_9, %c0_10, %c0_11], %25 {strides = array<i32>} : memref<1x16x128xbf16, #tpu.memory_space<vmem>>, vector<1x16x128xbf16>,
    %c16_i32 = arith.constant 16 : i32
    %26 = vector.broadcast %c16_i32 : i32 to vector<16x128xi32>
    %27 = arith.cmpi slt, %7, %26 : vector<16x128xi32>
    %cst_12 = arith.constant -1.000000e+00 : f32
    %28 = vector.broadcast %cst_12 : f32 to vector<16x128xf32>
    %29 = arith.select %27, %21, %28 : vector<16x128xi1>, vector<16x128xf32>
    %cst_13 = arith.constant dense<0xFF800000> : vector<16xf32>
    %30 = vector.multi_reduction <maximumf>, %29, %cst_13 [1] : vector<16x128xf32> to vector<16xf32>
    %31 = vector.shape_cast %30 : vector<16xf32> to vector<16x1xf32>
    %32 = vector.broadcast %31 : vector<16x1xf32> to vector<16x128xf32>
    %33 = arith.cmpf oge, %29, %32 : vector<16x128xf32>
    %c128_i32 = arith.constant 128 : i32
    %34 = vector.broadcast %c128_i32 : i32 to vector<16x128xi32>
    %35 = arith.select %33, %7, %34 : vector<16x128xi1>, vector<16x128xi32>
    %cst_14 = arith.constant dense<2147483647> : vector<16xi32>
    %36 = vector.multi_reduction <minsi>, %35, %cst_14 [1] : vector<16x128xi32> to vector<16xi32>
    %37 = vector.shape_cast %36 : vector<16xi32> to vector<16x1xi32>
    %38 = tpu.iota {dimensions = array<i32: 1>} : vector<16x128xi32>
    %c0_i32 = arith.constant 0 : i32
    %39 = vector.broadcast %c0_i32 : i32 to vector<16x128xi32>
    %40 = arith.cmpi eq, %38, %39 : vector<16x128xi32>
    %cst_15 = arith.constant 0.000000e+00 : f32
    %41 = vector.shape_cast %31 : vector<16x1xf32> to vector<16x1xf32>
    %42 = vector.broadcast %41 : vector<16x1xf32> to vector<16x128xf32>
    %43 = vector.broadcast %cst_15 : f32 to vector<16x128xf32>
    %44 = arith.select %40, %42, %43 : vector<16x128xi1>, vector<16x128xf32>
    %c1_i32 = arith.constant 1 : i32
    %45 = vector.broadcast %c1_i32 : i32 to vector<16x128xi32>
    %46 = arith.cmpi eq, %38, %45 : vector<16x128xi32>
    %47 = arith.sitofp %37 : vector<16x1xi32> to vector<16x1xf32>
    %cst_16 = arith.constant 0.000000e+00 : f32
    %48 = vector.shape_cast %47 : vector<16x1xf32> to vector<16x1xf32>
    %49 = vector.broadcast %48 : vector<16x1xf32> to vector<16x128xf32>
    %50 = vector.broadcast %cst_16 : f32 to vector<16x128xf32>
    %51 = arith.select %46, %49, %50 : vector<16x128xi1>, vector<16x128xf32>
    %52 = arith.addf %44, %51 : vector<16x128xf32>
    %c0_17 = arith.constant 0 : index
    %c0_18 = arith.constant 0 : index
    %c0_19 = arith.constant 0 : index
    %53 = vector.load %arg5[%c0_17, %c0_18, %c0_19] : memref<1x16x128xf32, #tpu.memory_space<vmem>>, vector<1x16x128xf32>
    %54 = vector.shape_cast %53 : vector<1x16x128xf32> to vector<16x128xf32>
    %55 = vector.shape_cast %52 : vector<16x128xf32> to vector<1x16x128xf32>
    tpu.vector_store %arg5[%c0_17, %c0_18, %c0_19], %55 {strides = array<i32>} : memref<1x16x128xf32, #tpu.memory_space<vmem>>, vector<1x16x128xf32>,
    return
  }
  func.func @transform_0(%arg0: i32, %arg1: i32) -> (i32, i32, i32) {
    %c0_i32 = arith.constant 0 : i32
    %c0_i32_0 = arith.constant 0 : i32
    return %arg0, %arg1, %c0_i32 : i32, i32, i32
  }
  func.func @transform_1(%arg0: i32, %arg1: i32) -> (i32, i32, i32) {
    %c0_i32 = arith.constant 0 : i32
    %c0_i32_0 = arith.constant 0 : i32
    %c0_i32_1 = arith.constant 0 : i32
    return %arg0, %c0_i32, %c0_i32_0 : i32, i32, i32
  }
  func.func @transform_2(%arg0: i32, %arg1: i32) -> (i32, i32, i32) {
    %c0_i32 = arith.constant 0 : i32
    %c0_i32_0 = arith.constant 0 : i32
    return %arg0, %arg1, %c0_i32 : i32, i32, i32
  }
  func.func @transform_3(%arg0: i32, %arg1: i32) -> (i32, i32, i32) {
    %c0_i32 = arith.constant 0 : i32
    %c0_i32_0 = arith.constant 0 : i32
    return %arg0, %arg1, %c0_i32 : i32, i32, i32
  }
}

</mosaic_0001>

<llo_original>
// kernel: tpu_custom_call.1
$region0: #{tpu_custom_call.1}
  #allocation0 [shape = 'u32[]', space=smem, size = 0x4, offset = 0x4, fixed_abs, tag = 'smem constant byte address 0x4 - core index']
  #allocation1 [shape = 'u32[72,128]{1,0:T(1,128)}', space=vmem, size = 0x9000, scoped, tag = 'internal scratch']
  %s0 = inlined_call_operand.hbm [shape: bf16[2,16,64], index: 0, kind: input, shape index: {}]
  %s1 = inlined_call_operand.hbm [shape: bf16[2,64,128], index: 1, kind: input, shape index: {}]
  %s2 = inlined_call_operand.hbm [shape: bf16[2,16,128], index: 2, kind: output, shape index: {0}]
  %s3 = inlined_call_operand.hbm [shape: f32[2,16,128], index: 3, kind: output, shape index: {1}]
  %4 = xla_tuple %s2, %s3
  %s5 = sld [smem:[#allocation0]]
  $region57: #{tpu_custom_call.1} parent=0
    _
  %s7 = ssub.s32 1, %s5
  %s8 = scalar_select 0, %s7, %s5
  $region1: #{tpu_custom_call.1} parent=0
    #allocation2 [shape = 'u8[8192]{0}', space=vmem, size = 0x2000, scoped, tag = 'input window, operand 0']
    #allocation3 [shape = 's32[2]{0}', space=sflag, size = 0x8, scoped, tag = 'scoped memory for tpu_custom_call.1']
    #allocation4 [shape = 's32[2]{0}', space=sflag, size = 0x8, scoped, tag = 'scoped memory for tpu_custom_call.1']
    #allocation5 [shape = 'u8[32768]{0}', space=vmem, size = 0x8000, scoped, tag = 'input window, operand 1']
    #allocation6 [shape = 's32[2]{0}', space=sflag, size = 0x8, scoped, tag = 'scoped memory for tpu_custom_call.1']
    #allocation7 [shape = 'u8[8192]{0}', space=vmem, size = 0x2000, scoped, tag = 'output window, operand 0']
    #allocation8 [shape = 'u8[16384]{0}', space=vmem, size = 0x4000, scoped, tag = 'output window, operand 1']
    #allocation9 [shape = 's32[2]{0}', space=sflag, size = 0x8, scoped, tag = 'scoped memory for tpu_custom_call.1']
    %9 = vsyncpa [#allocation3], 0
    %s10 = scalar_lea.sflag [#allocation3], 1
    %11 = vsyncpa %s10, 0
    %12 = vsyncpa [#allocation6], 0
    %s13 = scalar_lea.sflag [#allocation6], 1
    %14 = vsyncpa %s13, 0
    %15 = vsyncpa [#allocation4], 0
    %s16 = scalar_lea.sflag [#allocation4], 1
    %17 = vsyncpa %s16, 0
    %18 = vsyncpa [#allocation9], 0
    %s19 = scalar_lea.sflag [#allocation9], 1
    %20 = vsyncpa %s19, 0
    loop: start=0, step=1, limit=4
    $region2: #{tpu_custom_call.1} parent=1 // loop_pre_header
      _
    $region3: #{tpu_custom_call.1} parent=1 // loop_header
      %s22 = sphi 0, %s26
      %p23 = scmp.ge.s32.totalorder %s22, 4
      %s29 = sphi 0, %s41
      %s30 = sphi 0, %s37
      %s31 = sphi 0, %s29
      %s32 = sphi 0, %s30
      %s33 = sphi 0, %s31
      %s34 = sphi 0, %s32
      %s46 = sphi 0, %s48
      %s49 = sphi 0, %s46
      %s50 = sphi 0, %s49
      %s66 = sphi 0, %s50
      %s72 = sphi 0, %s74
      %s75 = sphi 0, %s72
      %s76 = sphi 0, %s75
      %s92 = sphi 0, %s76
      %s100 = sphi 0, %s102
      %s103 = sphi 0, %s100
      %s104 = sphi 0, %s103
      %s120 = sphi 0, %s104
      %s128 = sphi 0, %s130
      %s131 = sphi 0, %s128
      %s132 = sphi 0, %s131
      %s148 = sphi 0, %s132
    $region4: #{tpu_custom_call.1} parent=1 // loop_header_branch
      %25 = sbr.rel (%p23) target = $region8
    $region5: #{tpu_custom_call.1} parent=1 // loop_body
      %s27 = ssub.s32 %s22, 1
      %s28 = ssub.s32 %s22, 2
      %s35 = sadd.s32 1, %s30
      %p36 = scmp.ge.s32.totalorder %s35, 1
      %s37 = scalar_select %p36, 0, %s35
      %s38 = sadd.s32 1, %s29
      %s39 = scalar_select %p36, %s38, %s29
      %p40 = scmp.ge.s32.totalorder %s39, 2
      %s41 = scalar_select %p40, 0, %s39
      %s42 = ssub.s32 %s29, %s41
      %s43 = ssub.s32 %s30, %s37
      %s44 = sor.u32 %s42, %s43
      %p45 = scmp.eq.s32.totalorder %s44, 0
      %s47 = sadd.s32 %s46, 1
      %s48 = scalar_select %p45, %s46, %s47
      %p51 = pneg %p45
      %p52 = scmp.eq.s32.totalorder %s22, 1
      %p53 = por %p51, %p52
      %p54 = scmp.ne.s32.totalorder %s46, %s49
      %p55 = scmp.eq.s32.totalorder %s22, 0
      %p56 = por %p54, %p55
      %p57 = scmp.ne.s32.totalorder %s46, %s49
      %p58 = scmp.eq.s32.totalorder %s27, 1
      %p59 = por %p57, %p58
      %p60 = scmp.ne.s32.totalorder %s49, %s50
      %p61 = scmp.eq.s32.totalorder %s27, 0
      %p62 = por %p60, %p61
      %p63 = scmp.ne.s32.totalorder %s49, %s50
      %p64 = scmp.eq.s32.totalorder %s28, 1
      %p65 = por %p63, %p64
      %p67 = scmp.ne.s32.totalorder %s50, %s66
      %p68 = scmp.eq.s32.totalorder %s28, 0
      %p69 = por %p67, %p68
      %s70 = ssub.s32 %s29, %s41
      %p71 = scmp.eq.s32.totalorder %s70, 0
      %s73 = sadd.s32 %s72, 1
      %s74 = scalar_select %p71, %s72, %s73
      %p77 = pneg %p71
      %p78 = scmp.eq.s32.totalorder %s22, 1
      %p79 = por %p77, %p78
      %p80 = scmp.ne.s32.totalorder %s72, %s75
      %p81 = scmp.eq.s32.totalorder %s22, 0
      %p82 = por %p80, %p81
      %p83 = scmp.ne.s32.totalorder %s72, %s75
      %p84 = scmp.eq.s32.totalorder %s27, 1
      %p85 = por %p83, %p84
      %p86 = scmp.ne.s32.totalorder %s75, %s76
      %p87 = scmp.eq.s32.totalorder %s27, 0
      %p88 = por %p86, %p87
      %p89 = scmp.ne.s32.totalorder %s75, %s76
      %p90 = scmp.eq.s32.totalorder %s28, 1
      %p91 = por %p89, %p90
      %p93 = scmp.ne.s32.totalorder %s76, %s92
      %p94 = scmp.eq.s32.totalorder %s28, 0
      %p95 = por %p93, %p94
      %s96 = ssub.s32 %s29, %s41
      %s97 = ssub.s32 %s30, %s37
      %s98 = sor.u32 %s96, %s97
      %p99 = scmp.eq.s32.totalorder %s98, 0
      %s101 = sadd.s32 %s100, 1
      %s102 = scalar_select %p99, %s100, %s101
      %p105 = pneg %p99
      %p106 = scmp.eq.s32.totalorder %s22, 1
      %p107 = por %p105, %p106
      %p108 = scmp.ne.s32.totalorder %s100, %s103
      %p109 = scmp.eq.s32.totalorder %s22, 0
      %p110 = por %p108, %p109
      %p111 = scmp.ne.s32.totalorder %s100, %s103
      %p112 = scmp.eq.s32.totalorder %s27, 1
      %p113 = por %p111, %p112
      %p114 = scmp.ne.s32.totalorder %s103, %s104
      %p115 = scmp.eq.s32.totalorder %s27, 0
      %p116 = por %p114, %p115
      %p117 = scmp.ne.s32.totalorder %s103, %s104
      %p118 = scmp.eq.s32.totalorder %s28, 1
      %p119 = por %p117, %p118
      %p121 = scmp.ne.s32.totalorder %s104, %s120
      %p122 = scmp.eq.s32.totalorder %s28, 0
      %p123 = por %p121, %p122
      %s124 = ssub.s32 %s29, %s41
      %s125 = ssub.s32 %s30, %s37
      %s126 = sor.u32 %s124, %s125
      %p127 = scmp.eq.s32.totalorder %s126, 0
      %s129 = sadd.s32 %s128, 1
      %s130 = scalar_select %p127, %s128, %s129
      %p133 = pneg %p127
      %p134 = scmp.eq.s32.totalorder %s22, 1
      %p135 = por %p133, %p134
      %p136 = scmp.ne.s32.totalorder %s128, %s131
      %p137 = scmp.eq.s32.totalorder %s22, 0
      %p138 = por %p136, %p137
      %p139 = scmp.ne.s32.totalorder %s128, %s131
      %p140 = scmp.eq.s32.totalorder %s27, 1
      %p141 = por %p139, %p140
      %p142 = scmp.ne.s32.totalorder %s131, %s132
      %p143 = scmp.eq.s32.totalorder %s27, 0
      %p144 = por %p142, %p143
      %p145 = scmp.ne.s32.totalorder %s131, %s132
      %p146 = scmp.eq.s32.totalorder %s28, 1
      %p147 = por %p145, %p146
      %p149 = scmp.ne.s32.totalorder %s132, %s148
      %p150 = scmp.eq.s32.totalorder %s28, 0
      %p151 = por %p149, %p150
      %p152 = scmp.le.s32.totalorder 1, %s22
      %p153 = scmp.lt.s32.totalorder %s22, 3
      %p154 = pnand %p152, %p153
      %p155 = pneg %p154
      // Predicated region
      $region9: #{tpu_custom_call.1} parent=5 // pred_check
        _
      $region10: #{tpu_custom_call.1} parent=5 // pred_check_branch
        %157 = sbr.rel (%p154) target = $region12
      $region11: #{tpu_custom_call.1} parent=5 // pred_region
        %s158 = ssub.s32 %s22, 1
      $region12: #{tpu_custom_call.1} parent=5 // pred_fallthru
        _
      %p159 = scmp.lt.s32.totalorder %s22, 2
      // Predicated region
      $region13: #{tpu_custom_call.1} parent=5 // pred_check
        %p160 = pneg %p159
      $region14: #{tpu_custom_call.1} parent=5 // pred_check_branch
        %162 = sbr.rel (%p160) target = $region16
      $region15: #{tpu_custom_call.1} parent=5 // pred_region
        // Predicated region
        $region17: #{tpu_custom_call.1} parent=15 // pred_check
          %p163 = pneg %p56
        $region18: #{tpu_custom_call.1} parent=15 // pred_check_branch
          %165 = sbr.rel (%p163) target = $region20
        $region19: #{tpu_custom_call.1} parent=15 // pred_region
          %s166 = sand.u32 %s46, 1
          %s167 = scalar_lea.sflag [#allocation3], %s166
          %s168 = sand.u32 %s46, 1
          %s169 = smul.addr %s168, 8
          %s170 = scalar_lea.vmem [#allocation2], %s169
          %s171 = smul.u32 2, %s30
          %173 = vsyncadd %s167, 0
          %s174 = smul.addr %s29, 2
          %s175 = sadd.s32 %s171, %s174
          %s176 = smul.addr %s175, 4
          %s177 = scalar_lea.hbm %s0, %s176
          %s178 = sshll.u32 %s177, 4
          %s179 = int_to_ptr.hbm [resolvable:$true] %s178
          %s180 = sshll.u32 %s170, 4
          %s181 = int_to_ptr.vmem [resolvable:$true] %s180
          %186 = dma.hbm_to_vmem [thread:$0]  %s179, 128, %s181, %s167, 64, 64, 4
        $region20: #{tpu_custom_call.1} parent=15 // pred_fallthru
          _
        // Predicated region
        $region21: #{tpu_custom_call.1} parent=15 // pred_check
          %p187 = pneg %p82
        $region22: #{tpu_custom_call.1} parent=15 // pred_check_branch
          %189 = sbr.rel (%p187) target = $region24
        $region23: #{tpu_custom_call.1} parent=15 // pred_region
          %s190 = sand.u32 %s72, 1
          %s191 = scalar_lea.sflag [#allocation6], %s190
          %s192 = sand.u32 %s72, 1
          %s193 = smul.addr %s192, 32
          %s194 = scalar_lea.vmem [#allocation5], %s193
          %196 = vsyncadd %s191, 0
          %s197 = smul.addr %s29, 8
          %s198 = smul.addr %s197, 4
          %s199 = scalar_lea.hbm %s1, %s198
          %s200 = sshll.u32 %s199, 4
          %s201 = int_to_ptr.hbm [resolvable:$true] %s200
          %s202 = sshll.u32 %s194, 4
          %s203 = int_to_ptr.vmem [resolvable:$true] %s202
          %208 = dma.hbm_to_vmem [thread:$0]  %s201, 512, %s203, %s191, 64, 64, 4
        $region24: #{tpu_custom_call.1} parent=15 // pred_fallthru
          _
      $region16: #{tpu_custom_call.1} parent=5 // pred_fallthru
        _
      %p209 = scmp.le.s32.totalorder 1, %s22
      %p210 = scmp.lt.s32.totalorder %s22, 3
      %p211 = pnand %p209, %p210
      %p212 = pneg %p211
      // Predicated region
      $region25: #{tpu_custom_call.1} parent=5 // pred_check
        _
      $region26: #{tpu_custom_call.1} parent=5 // pred_check_branch
        %214 = sbr.rel (%p211) target = $region28
      $region27: #{tpu_custom_call.1} parent=5 // pred_region
        %s215 = ssub.s32 %s22, 1
        %s216 = sand.u32 %s49, 1
        %s217 = scalar_lea.sflag [#allocation3], %s216
        %s218 = sand.u32 %s49, 1
        %s219 = smul.addr %s218, 8
        %s220 = scalar_lea.vmem [#allocation2], %s219
        // Predicated region
        $region29: #{tpu_custom_call.1} parent=27 // pred_check
          %p221 = pneg %p62
        $region30: #{tpu_custom_call.1} parent=27 // pred_check_branch
          %223 = sbr.rel (%p221) target = $region32
        $region31: #{tpu_custom_call.1} parent=27 // pred_region
          %225 = dma.done %s217, 128
        $region32: #{tpu_custom_call.1} parent=27 // pred_fallthru
          _
        %s226 = sand.u32 %s75, 1
        %s227 = scalar_lea.sflag [#allocation6], %s226
        %s228 = sand.u32 %s75, 1
        %s229 = smul.addr %s228, 32
        %s230 = scalar_lea.vmem [#allocation5], %s229
        // Predicated region
        $region33: #{tpu_custom_call.1} parent=27 // pred_check
          %p231 = pneg %p88
        $region34: #{tpu_custom_call.1} parent=27 // pred_check_branch
          %233 = sbr.rel (%p231) target = $region36
        $region35: #{tpu_custom_call.1} parent=27 // pred_region
          %235 = dma.done %s227, 512
        $region36: #{tpu_custom_call.1} parent=27 // pred_fallthru
          _
        %s236 = sand.u32 %s49, 1
        %s237 = scalar_lea.sflag [#allocation3], %s236
        %s238 = sand.u32 %s49, 1
        %s239 = smul.addr %s238, 8
        %s240 = scalar_lea.vmem [#allocation2], %s239
        %p241 = pneg %p62
        %p242 = pneg %p59
        %s243 = sand.u32 %s75, 1
        %s244 = scalar_lea.sflag [#allocation6], %s243
        %s245 = sand.u32 %s75, 1
        %s246 = smul.addr %s245, 32
        %s247 = scalar_lea.vmem [#allocation5], %s246
        %p248 = pneg %p88
        %p249 = pneg %p85
        %p250 = pneg %p116
        %p251 = pneg %p113
        %s252 = sand.u32 %s103, 1
        %s253 = scalar_lea.sflag [#allocation4], %s252
        %s254 = sand.u32 %s103, 1
        %s255 = smul.addr %s254, 8
        %s256 = scalar_lea.vmem [#allocation7], %s255
        %p257 = pneg %p144
        %p258 = pneg %p141
        %s259 = sand.u32 %s131, 1
        %s260 = scalar_lea.sflag [#allocation9], %s259
        %s261 = sand.u32 %s131, 1
        %s262 = smul.addr %s261, 16
        %s263 = scalar_lea.vmem [#allocation8], %s262
        %s264 = smul.u32 2, %s32
        %s265 = smul.u32 2, %s32
        %s266 = smul.u32 2, %s32
        %v268 = vld [vmem:[%s220] sm:$0xf]
        %v269 = vld [vmem:[%s220 + $0x4] sm:$0xf]
        %v270 = vld [vmem:[%s230] sm:$0xf]
        %v271 = vld [vmem:[%s230 + $0x4] sm:$0xf]
        %v272 = vld [vmem:[%s230 + $0x8] sm:$0xf]
        %v273 = vld [vmem:[%s230 + $0xc] sm:$0xf]
        %v274 = vld [vmem:[%s230 + $0x10] sm:$0xf]
        %v275 = vld [vmem:[%s230 + $0x14] sm:$0xf]
        %v276 = vld [vmem:[%s230 + $0x18] sm:$0xf]
        %v277 = vld [vmem:[%s230 + $0x1c] sm:$0xf]
        %v280 = vunpack.c.l.b16 %v268
        %v281 = vunpack.c.l.b16 %v269
        %v282 = vpack.c.b16 %v281, %v280
        %v291 = vunpack.c.l.b16 %v270
        %v292 = vunpack.c.l.b16 %v271
        %v293 = vunpack.c.l.b16 %v272
        %v294 = vunpack.c.l.b16 %v273
        %v295 = vunpack.c.l.b16 %v274
        %v296 = vunpack.c.l.b16 %v275
        %v297 = vunpack.c.l.b16 %v276
        %v298 = vunpack.c.l.b16 %v277
        %v299 = vpack.c.b16 %v292, %v291
        %v300 = vpack.c.b16 %v294, %v293
        %v301 = vpack.c.b16 %v296, %v295
        %v302 = vpack.c.b16 %v298, %v297
        %vm307 = vcmask 523264
        %v309 = vsel %vm307, %v282, 0
        %311 = vmatpush.bf16.msra.mxu0 0
        %312 = vmatpush.bf16.msra.mxu0 0
        %313 = vmatpush.bf16.msra.mxu0 0
        %314 = vmatpush.bf16.msra.mxu0 0
        %315 = vmatpush.bf16.msra.mxu0 %v302
        %316 = vmatpush.bf16.msra.mxu0 %v301
        %317 = vmatpush.bf16.msra.mxu0 %v300
        %318 = vmatpush.bf16.msra.mxu0 %v299
        %319 = vmatmul.bf16.gmra.mxu0 %v309
        %v320 = vpop.f32.mrf.mxu0
        %v321 = vadd.f32 0.0, %v320
        %v322 = vpop.f32.mrf.mxu0
        %v323 = vadd.f32 0.0, %v322
        %324 = vdwg.mxu0
        %v325 = vmul.f32 %v321, 0.125
        %v326 = vmul.f32 %v323, 0.125
        %v327 = vlaneseq
        %v328 = vand.u32 %v327, 127
        %vm329 = vcmp.lt.s32.totalorder %v328, 17
        %v330 = vsel %vm329, %v325, -1e+30
        %v331 = vsel %vm329, %v326, -1e+30
        %332 = vmax.xlane.f32.xlu0 %v330
        %v333 = vpop.xlane.xlu0 %332
        %334 = vmax.xlane.f32.xlu0 %v331
        %v335 = vpop.xlane.xlu0 %334
        %v336 = vsub.f32 %v330, %v333
        %v337 = vsub.f32 %v331, %v335
        %v338 = vmul.f32 %v336, 1.442695
        %v339 = vpow.pop %v338
        %v340 = vmul.f32 %v337, 1.442695
        %v341 = vpow.pop %v340
        %342 = vadd.xlane.f32.xlu0 %v339
        %v343 = vpop.xlane.xlu0 %342
        %344 = vadd.xlane.f32.xlu0 %v341
        %v345 = vpop.xlane.xlu0 %344
        %v346 = vrcp.pop %v343
        %v347 = vrcp.pop %v345
        %v348 = vmul.f32 %v339, %v346
        %v349 = vmul.f32 %v341, %v347
        %v350 = vpack.c.bf16 %v348, %v348
        %v351 = vpack.c.bf16 %v349, %v349
        %352 = vst [vmem:[%s256] sm:$0xf] %v350
        %353 = vst [vmem:[%s256 + $0x4] sm:$0xf] %v351
        %vm354 = vcmp.lt.s32.totalorder %v328, 16
        %v355 = vsel %vm354, %v348, -1.0
        %v356 = vsel %vm354, %v349, -1.0
        %357 = vmax.xlane.f32.xlu0 %v355
        %v358 = vpop.xlane.xlu0 %357
        %359 = vmax.xlane.f32.xlu0 %v356
        %v360 = vpop.xlane.xlu0 %359
        %vm361 = vcmp.ge.f32.partialorder %v355, %v358
        %vm362 = vcmp.ge.f32.partialorder %v356, %v360
        %v363 = vsel %vm361, %v328, 128
        %v364 = vsel %vm362, %v328, 128
        %v365 = vand.u32 %v363, 65535
        %v366 = vshra.s32 %v363, 16
        %v367 = vcvt.s32.f32 %v365
        %v368 = vcvt.s32.f32 %v366
        %369 = vmin.xlane.f32.xlu0 %v368
        %v370 = vpop.xlane.xlu0 %369
        %vm371 = vcmp.eq.f32.partialorder %v368, %v370
        %v372 = vsel %vm371, %v367, inf
        %373 = vmin.xlane.f32.xlu0 %v372
        %v374 = vpop.xlane.xlu0 %373
        %v375 = vcvt.f32.s32 %v374
        %v376 = vcvt.f32.s32 %v370
        %v377 = vshll.u32 %v376, 16
        %v378 = vadd.s32 %v377, %v375
        %v379 = vand.u32 %v364, 65535
        %v380 = vshra.s32 %v364, 16
        %v381 = vcvt.s32.f32 %v379
        %v382 = vcvt.s32.f32 %v380
        %383 = vmin.xlane.f32.xlu0 %v382
        %v384 = vpop.xlane.xlu0 %383
        %vm385 = vcmp.eq.f32.partialorder %v382, %v384
        %v386 = vsel %vm385, %v381, inf
        %387 = vmin.xlane.f32.xlu0 %v386
        %v388 = vpop.xlane.xlu0 %387
        %v389 = vcvt.f32.s32 %v388
        %v390 = vcvt.f32.s32 %v384
        %v391 = vshll.u32 %v390, 16
        %v392 = vadd.s32 %v391, %v389
        %vm393 = vcmp.eq.s32.totalorder %v328, 0
        %v394 = vsel %vm393, %v358, 0.0
        %v395 = vsel %vm393, %v360, 0.0
        %vm396 = vcmp.eq.s32.totalorder %v328, 1
        %v397 = vcvt.s32.f32 %v378
        %v398 = vcvt.s32.f32 %v392
        %v399 = vsel %vm396, %v397, 0.0
        %v400 = vsel %vm396, %v398, 0.0
        %v401 = vadd.f32 %v394, %v399
        %v402 = vadd.f32 %v395, %v400
        %403 = vst [vmem:[%s263] sm:$0xff] %v401
        %404 = vst [vmem:[%s263 + $0x8] sm:$0xff] %v402
        %s405 = sand.u32 %s103, 1
        %s406 = scalar_lea.sflag [#allocation4], %s405
        %s407 = sand.u32 %s103, 1
        %s408 = smul.addr %s407, 8
        %s409 = scalar_lea.vmem [#allocation7], %s408
        %s410 = sand.u32 %s131, 1
        %s411 = scalar_lea.sflag [#allocation9], %s410
        %s412 = sand.u32 %s131, 1
        %s413 = smul.addr %s412, 16
        %s414 = scalar_lea.vmem [#allocation8], %s413
        // Predicated region
        $region37: #{tpu_custom_call.1} parent=27 // pred_check
          %p415 = pneg %p113
        $region38: #{tpu_custom_call.1} parent=27 // pred_check_branch
          %417 = sbr.rel (%p415) target = $region40
        $region39: #{tpu_custom_call.1} parent=27 // pred_region
          %s418 = smul.u32 2, %s32
          %420 = vsyncadd %s406, 0
          %s421 = smul.addr %s31, 2
          %s422 = sadd.s32 %s418, %s421
          %s423 = smul.addr %s422, 4
          %s424 = scalar_lea.hbm %s2, %s423
          %s425 = sshll.u32 %s409, 4
          %s426 = int_to_ptr.vmem [resolvable:$true] %s425
          %s427 = sshll.u32 %s424, 4
          %s428 = int_to_ptr.hbm [resolvable:$true] %s427
          %433 = dma.vmem_to_hbm [thread:$0]  %s426, 128, %s428, %s406, 64, 64, 4
        $region40: #{tpu_custom_call.1} parent=27 // pred_fallthru
          _
        // Predicated region
        $region41: #{tpu_custom_call.1} parent=27 // pred_check
          %p434 = pneg %p141
        $region42: #{tpu_custom_call.1} parent=27 // pred_check_branch
          %436 = sbr.rel (%p434) target = $region44
        $region43: #{tpu_custom_call.1} parent=27 // pred_region
          %s437 = smul.u32 2, %s32
          %439 = vsyncadd %s411, 0
          %s440 = smul.addr %s31, 2
          %s441 = sadd.s32 %s437, %s440
          %s442 = smul.addr %s441, 8
          %s443 = scalar_lea.hbm %s3, %s442
          %s444 = sshll.u32 %s414, 4
          %s445 = int_to_ptr.vmem [resolvable:$true] %s444
          %s446 = sshll.u32 %s443, 4
          %s447 = int_to_ptr.hbm [resolvable:$true] %s446
          %452 = dma.vmem_to_hbm [thread:$0]  %s445, 256, %s447, %s411, 128, 128, 8
        $region44: #{tpu_custom_call.1} parent=27 // pred_fallthru
          _
      $region28: #{tpu_custom_call.1} parent=5 // pred_fallthru
        _
      %p453 = scmp.le.s32.totalorder 2, %s22
      // Predicated region
      $region45: #{tpu_custom_call.1} parent=5 // pred_check
        %p454 = pneg %p453
      $region46: #{tpu_custom_call.1} parent=5 // pred_check_branch
        %456 = sbr.rel (%p454) target = $region48
      $region47: #{tpu_custom_call.1} parent=5 // pred_region
        %s457 = ssub.s32 %s22, 2
        // Predicated region
        $region49: #{tpu_custom_call.1} parent=47 // pred_check
          %p458 = pneg %p119
        $region50: #{tpu_custom_call.1} parent=47 // pred_check_branch
          %460 = sbr.rel (%p458) target = $region52
        $region51: #{tpu_custom_call.1} parent=47 // pred_region
          %s461 = sand.u32 %s104, 1
          %s462 = scalar_lea.sflag [#allocation4], %s461
          %s463 = sand.u32 %s104, 1
          %s464 = smul.addr %s463, 8
          %s465 = scalar_lea.vmem [#allocation7], %s464
          %467 = dma.done %s462, 128
        $region52: #{tpu_custom_call.1} parent=47 // pred_fallthru
          _
        // Predicated region
        $region53: #{tpu_custom_call.1} parent=47 // pred_check
          %p468 = pneg %p147
        $region54: #{tpu_custom_call.1} parent=47 // pred_check_branch
          %470 = sbr.rel (%p468) target = $region56
        $region55: #{tpu_custom_call.1} parent=47 // pred_region
          %s471 = sand.u32 %s132, 1
          %s472 = scalar_lea.sflag [#allocation9], %s471
          %s473 = sand.u32 %s132, 1
          %s474 = smul.addr %s473, 16
          %s475 = scalar_lea.vmem [#allocation8], %s474
          %477 = dma.done %s472, 256
        $region56: #{tpu_custom_call.1} parent=47 // pred_fallthru
          _
      $region48: #{tpu_custom_call.1} parent=5 // pred_fallthru
        _
    $region6: #{tpu_custom_call.1} parent=1 // loop_footer
      %s26 = sadd.s32 1, %s22
    $region7: #{tpu_custom_call.1} parent=1 // loop_footer_branch
      %21 = sbr.rel target = $region3
    $region8: #{tpu_custom_call.1} parent=1 // loop_exit
      _
    %478 = vsyncpa [#allocation3], 1
    %s479 = scalar_lea.sflag [#allocation3], 1
    %480 = vsyncpa %s479, 1
    %481 = vsyncpa [#allocation6], 1
    %s482 = scalar_lea.sflag [#allocation6], 1
    %483 = vsyncpa %s482, 1
    %484 = vsyncpa [#allocation4], 1
    %s485 = scalar_lea.sflag [#allocation4], 1
    %486 = vsyncpa %s485, 1
    %487 = vsyncpa [#allocation9], 1
    %s488 = scalar_lea.sflag [#allocation9], 1
    %489 = vsyncpa %s488, 1

</llo_original>
